<compile_context>
chip_gen: v5e
topology: v5e:2x2
jax: 0.10.0
libtpu: 0.0.40
codegen_flags: <defaults>
</compile_context>

<pallas_src>
import jax
import jax.numpy as jnp
from jax.experimental import pallas as pl
from jax.experimental.pallas import tpu as pltpu

F_IN = 2      # nn.Linear(2, 2)
F_PAD = 128   # one vreg lane width
SUBLANES = 8  # sublane granularity


def _linear2_kernel(x_ref, xs_ref, p_ref, y_ref):
    """y = x @ W.T + b for a 2->2 Linear, computed purely on the VPU.

    x_ref  : (Np, 128) f32, features in lanes 0..1, zeros elsewhere.
    xs_ref : (Np, 128) f32, same rows with the two features swapped
             (lane0 = x1, lane1 = x0), zeros elsewhere.
    p_ref  : (6,) f32 in SMEM = [w00, w01, w10, w11, b0, b1].
    y_ref  : (Np, 128) f32, result in lanes 0..1, zeros elsewhere.
    """
    lane = jax.lax.broadcasted_iota(jnp.int32, y_ref.shape, 1)
    is0 = lane == 0
    is1 = lane == 1

    w00 = p_ref[0]
    w01 = p_ref[1]
    w10 = p_ref[2]
    w11 = p_ref[3]
    b0 = p_ref[4]
    b1 = p_ref[5]

    # Broadcast planes built from SMEM scalars (zero outside lanes 0..1).
    w_x = jnp.where(is0, w00, 0.0) + jnp.where(is1, w11, 0.0)   # multiplies x
    w_xs = jnp.where(is0, w01, 0.0) + jnp.where(is1, w10, 0.0)  # multiplies swapped x
    bias = jnp.where(is0, b0, 0.0) + jnp.where(is1, b1, 0.0)

    y_ref[...] = x_ref[...] * w_x + xs_ref[...] * w_xs + bias


def module_a_forward(x, weight, bias):
    """Forward of PyTorch module A: y = x @ weight.T + bias.

    x: (n, 2) f32.  weight: (2, 2) torch layout (out, in).  bias: (2,) f32.
    """
    n, f = x.shape
    assert f == F_IN
    n_pad = ((n + SUBLANES - 1) // SUBLANES) * SUBLANES

    # Minimal host prologue: one reverse, two pads, one concat (all tiny).
    x_pad = jnp.pad(x, ((0, n_pad - n), (0, F_PAD - F_IN)))
    xs_pad = jnp.pad(x[:, ::-1], ((0, n_pad - n), (0, F_PAD - F_IN)))
    params = jnp.concatenate([weight.reshape(-1), bias]).astype(jnp.float32)

    y_pad = pl.pallas_call(
        _linear2_kernel,
        out_shape=jax.ShapeDtypeStruct((n_pad, F_PAD), jnp.float32),
        in_specs=[
            pl.BlockSpec(memory_space=pltpu.MemorySpace.VMEM),
            pl.BlockSpec(memory_space=pltpu.MemorySpace.VMEM),
            pl.BlockSpec(memory_space=pltpu.MemorySpace.SMEM),
        ],
        out_specs=pl.BlockSpec(memory_space=pltpu.MemorySpace.VMEM),
    )(x_pad, xs_pad, params)

    return y_pad[:n, :F_IN]


def _reference(x, weight, bias):
    """Pure-JAX reference of A.forward for verification."""
    return x @ weight.T + bias


if __name__ == "__main__":
    # Deterministic parameters (PyTorch-style uniform(-1/sqrt(in), 1/sqrt(in)))
    # and deterministic input, all from PRNGKey(0).
    key = jax.random.PRNGKey(0)
    kx, kw, kb = jax.random.split(key, 3)
    limit = 1.0 / jnp.sqrt(jnp.float32(F_IN))
    weight = jax.random.uniform(kw, (F_IN, F_IN), jnp.float32, -limit, limit)
    bias = jax.random.uniform(kb, (F_IN,), jnp.float32, -limit, limit)
    x = jax.random.normal(kx, (8, F_IN), jnp.float32)

    y = module_a_forward(x, weight, bias)
    jax.block_until_ready(y)

    y_ref = _reference(x, weight, bias)
    assert jnp.allclose(y, y_ref, atol=1e-5, rtol=1e-5)
    print("KERNEL_OK")
</pallas_src>

<mosaic_0001>
module attributes {stable_mosaic.version = 11 : i64} {
  func.func @_linear2_kernel(%arg0: memref<8x128xf32, #tpu.memory_space<vmem>>, %arg1: memref<8x128xf32, #tpu.memory_space<vmem>>, %arg2: memref<6xf32, #tpu.memory_space<smem>>, %arg3: memref<8x128xf32, #tpu.memory_space<vmem>>) attributes {dimension_semantics = [], scalar_prefetch = 0 : i64, scratch_operands = 0 : i64, tpu.core_type = #tpu.core_type<tc>} {
    %0 = tpu.iota {dimensions = array<i32: 1>} : vector<8x128xi32>
    %c0_i32 = arith.constant 0 : i32
    %1 = vector.broadcast %c0_i32 : i32 to vector<8x128xi32>
    %2 = arith.cmpi eq, %0, %1 : vector<8x128xi32>
    %c1_i32 = arith.constant 1 : i32
    %3 = vector.broadcast %c1_i32 : i32 to vector<8x128xi32>
    %4 = arith.cmpi eq, %0, %3 : vector<8x128xi32>
    %c0 = arith.constant 0 : index
    %5 = memref.load %arg2[%c0] : memref<6xf32, #tpu.memory_space<smem>>
    %c1 = arith.constant 1 : index
    %6 = memref.load %arg2[%c1] : memref<6xf32, #tpu.memory_space<smem>>
    %c2 = arith.constant 2 : index
    %7 = memref.load %arg2[%c2] : memref<6xf32, #tpu.memory_space<smem>>
    %c3 = arith.constant 3 : index
    %8 = memref.load %arg2[%c3] : memref<6xf32, #tpu.memory_space<smem>>
    %c4 = arith.constant 4 : index
    %9 = memref.load %arg2[%c4] : memref<6xf32, #tpu.memory_space<smem>>
    %c5 = arith.constant 5 : index
    %10 = memref.load %arg2[%c5] : memref<6xf32, #tpu.memory_space<smem>>
    %cst = arith.constant 0.000000e+00 : f32
    %11 = vector.broadcast %5 : f32 to vector<8x128xf32>
    %12 = vector.broadcast %cst : f32 to vector<8x128xf32>
    %13 = arith.select %2, %11, %12 : vector<8x128xi1>, vector<8x128xf32>
    %cst_0 = arith.constant 0.000000e+00 : f32
    %14 = vector.broadcast %8 : f32 to vector<8x128xf32>
    %15 = vector.broadcast %cst_0 : f32 to vector<8x128xf32>
    %16 = arith.select %4, %14, %15 : vector<8x128xi1>, vector<8x128xf32>
    %17 = arith.addf %13, %16 : vector<8x128xf32>
    %cst_1 = arith.constant 0.000000e+00 : f32
    %18 = vector.broadcast %6 : f32 to vector<8x128xf32>
    %19 = vector.broadcast %cst_1 : f32 to vector<8x128xf32>
    %20 = arith.select %2, %18, %19 : vector<8x128xi1>, vector<8x128xf32>
    %cst_2 = arith.constant 0.000000e+00 : f32
    %21 = vector.broadcast %7 : f32 to vector<8x128xf32>
    %22 = vector.broadcast %cst_2 : f32 to vector<8x128xf32>
    %23 = arith.select %4, %21, %22 : vector<8x128xi1>, vector<8x128xf32>
    %24 = arith.addf %20, %23 : vector<8x128xf32>
    %cst_3 = arith.constant 0.000000e+00 : f32
    %25 = vector.broadcast %9 : f32 to vector<8x128xf32>
    %26 = vector.broadcast %cst_3 : f32 to vector<8x128xf32>
    %27 = arith.select %2, %25, %26 : vector<8x128xi1>, vector<8x128xf32>
    %cst_4 = arith.constant 0.000000e+00 : f32
    %28 = vector.broadcast %10 : f32 to vector<8x128xf32>
    %29 = vector.broadcast %cst_4 : f32 to vector<8x128xf32>
    %30 = arith.select %4, %28, %29 : vector<8x128xi1>, vector<8x128xf32>
    %31 = arith.addf %27, %30 : vector<8x128xf32>
    %c0_5 = arith.constant 0 : index
    %c0_6 = arith.constant 0 : index
    %32 = vector.load %arg0[%c0_5, %c0_6] : memref<8x128xf32, #tpu.memory_space<vmem>>, vector<8x128xf32>
    %33 = arith.mulf %32, %17 : vector<8x128xf32>
    %c0_7 = arith.constant 0 : index
    %c0_8 = arith.constant 0 : index
    %34 = vector.load %arg1[%c0_7, %c0_8] : memref<8x128xf32, #tpu.memory_space<vmem>>, vector<8x128xf32>
    %35 = arith.mulf %34, %24 : vector<8x128xf32>
    %36 = arith.addf %33, %35 : vector<8x128xf32>
    %37 = arith.addf %36, %31 : vector<8x128xf32>
    %c0_9 = arith.constant 0 : index
    %c0_10 = arith.constant 0 : index
    %38 = vector.load %arg3[%c0_9, %c0_10] : memref<8x128xf32, #tpu.memory_space<vmem>>, vector<8x128xf32>
    tpu.vector_store %arg3[%c0_9, %c0_10], %37 {strides = array<i32>} : memref<8x128xf32, #tpu.memory_space<vmem>>, vector<8x128xf32>,
    return
  }
}

</mosaic_0001>

<llo_original>
// kernel: tpu_custom_call.1
$region0: #{tpu_custom_call.1}
  #allocation0 [shape = 'u32[]', space=smem, size = 0x4, offset = 0x4, fixed_abs, tag = 'smem constant byte address 0x4 - core index']
  #allocation1 [shape = 'u32[72,128]{1,0:T(1,128)}', space=vmem, size = 0x9000, scoped, tag = 'internal scratch']
  %s0 = inlined_call_operand.hbm [shape: f32[8,128], index: 0, kind: input, shape index: {}]
  %s1 = inlined_call_operand.hbm [shape: f32[8,128], index: 1, kind: input, shape index: {}]
  %s2 = inlined_call_operand.vmem [shape: f32[6], index: 2, kind: input, shape index: {}]
  %s3 = inlined_call_operand.hbm [shape: f32[8,128], index: 3, kind: output, shape index: {}]
  %s4 = sld [smem:[#allocation0]]
  $region34: #{tpu_custom_call.1} parent=0
    _
  %s6 = ssub.s32 1, %s4
  %s7 = scalar_select 0, %s6, %s4
  $region1: #{tpu_custom_call.1} parent=0
    #allocation2 [shape = 'u8[4096]{0}', space=vmem, size = 0x1000, scoped, tag = 'input window, operand 0, single buffered']
    #allocation3 [shape = 's32[1]{0}', space=sflag, size = 0x4, scoped, tag = 'scoped memory for tpu_custom_call.1']
    #allocation4 [shape = 's32[1]{0}', space=sflag, size = 0x4, scoped, tag = 'scoped memory for tpu_custom_call.1']
    #allocation5 [shape = 's32[1]{0}', space=sflag, size = 0x4, scoped, tag = 'scoped memory for tpu_custom_call.1']
    #allocation6 [shape = 'u8[4096]{0}', space=vmem, size = 0x1000, scoped, tag = 'input window, operand 1, single buffered']
    #allocation7 [shape = 's32[1]{0}', space=sflag, size = 0x4, scoped, tag = 'scoped memory for tpu_custom_call.1']
    #allocation8 [shape = 'u8[512]{0}', space=smem, size = 0x200, scoped, tag = 'input window, operand 2, single buffered']
    #allocation9 [shape = 'u8[4096]{0}', space=vmem, size = 0x1000, scoped, tag = 'output window, operand 0, single buffered']
    %8 = vsyncpa [#allocation3], 0
    %9 = vsyncpa [#allocation7], 0
    %10 = vsyncpa [#allocation5], 0
    %11 = vsyncpa [#allocation4], 0
    // Predicated region
    $region2: #{tpu_custom_call.1} parent=1 // pred_check
      _
    $region3: #{tpu_custom_call.1} parent=1 // pred_check_branch
      %13 = sbr.rel (0) target = $region5
    $region4: #{tpu_custom_call.1} parent=1 // pred_region
      %15 = vsyncadd [#allocation3], 0
      %s17 = sshll.u32 %s0, 4
      %s18 = int_to_ptr.hbm [resolvable:$true] %s17
      %s19 = sshll.u32 [#allocation2], 4
      %s20 = int_to_ptr.vmem [resolvable:$true] %s19
      %22 = dma.hbm_to_vmem [thread:$0]  %s18, 128, %s20, [#allocation3]
    $region5: #{tpu_custom_call.1} parent=1 // pred_fallthru
      _
    // Predicated region
    $region6: #{tpu_custom_call.1} parent=1 // pred_check
      _
    $region7: #{tpu_custom_call.1} parent=1 // pred_check_branch
      %24 = sbr.rel (0) target = $region9
    $region8: #{tpu_custom_call.1} parent=1 // pred_region
      %26 = vsyncadd [#allocation7], 0
      %s28 = sshll.u32 %s1, 4
      %s29 = int_to_ptr.hbm [resolvable:$true] %s28
      %s30 = sshll.u32 [#allocation6], 4
      %s31 = int_to_ptr.vmem [resolvable:$true] %s30
      %33 = dma.hbm_to_vmem [thread:$0]  %s29, 128, %s31, [#allocation7]
    $region9: #{tpu_custom_call.1} parent=1 // pred_fallthru
      _
    // Predicated region
    $region10: #{tpu_custom_call.1} parent=1 // pred_check
      _
    $region11: #{tpu_custom_call.1} parent=1 // pred_check_branch
      %35 = sbr.rel (0) target = $region13
    $region12: #{tpu_custom_call.1} parent=1 // pred_region
      %37 = vsyncadd [#allocation5], 0
      %s39 = sshll.u32 %s2, 4
      %s40 = int_to_ptr.vmem [resolvable:$true] %s39
      %42 = dma.vmem_to_smem %s40, 16, [#allocation8], [#allocation5]
    $region13: #{tpu_custom_call.1} parent=1 // pred_fallthru
      _
    // Predicated region
    $region14: #{tpu_custom_call.1} parent=1 // pred_check
      _
    $region15: #{tpu_custom_call.1} parent=1 // pred_check_branch
      %44 = sbr.rel (0) target = $region17
    $region16: #{tpu_custom_call.1} parent=1 // pred_region
      %46 = dma.done [#allocation3], 128
    $region17: #{tpu_custom_call.1} parent=1 // pred_fallthru
      _
    // Predicated region
    $region18: #{tpu_custom_call.1} parent=1 // pred_check
      _
    $region19: #{tpu_custom_call.1} parent=1 // pred_check_branch
      %48 = sbr.rel (0) target = $region21
    $region20: #{tpu_custom_call.1} parent=1 // pred_region
      %50 = dma.done [#allocation7], 128
    $region21: #{tpu_custom_call.1} parent=1 // pred_fallthru
      _
    // Predicated region
    $region22: #{tpu_custom_call.1} parent=1 // pred_check
      _
    $region23: #{tpu_custom_call.1} parent=1 // pred_check_branch
      %52 = sbr.rel (0) target = $region25
    $region24: #{tpu_custom_call.1} parent=1 // pred_region
      %54 = dma.done [#allocation5], 16
    $region25: #{tpu_custom_call.1} parent=1 // pred_fallthru
      _
    %55 = sfence
    %v56 = vlaneseq
    %v57 = vand.u32 %v56, 127
    %vm58 = vcmp.eq.s32.totalorder %v57, 0
    %vm59 = vcmp.eq.s32.totalorder %v57, 1
    %s60 = sld [smem:[#allocation8]]
    %s61 = sld [smem:[#allocation8 + $0x1]]
    %s62 = sld [smem:[#allocation8 + $0x2]]
    %s63 = sld [smem:[#allocation8 + $0x3]]
    %s64 = sld [smem:[#allocation8 + $0x4]]
    %s65 = sld [smem:[#allocation8 + $0x5]]
    %v66 = vstv %s60
    %v67 = vsel %vm58, %v66, 0.0
    %v68 = vstv %s63
    %v69 = vsel %vm59, %v68, 0.0
    %v70 = vadd.f32 %v67, %v69
    %v71 = vstv %s61
    %v72 = vsel %vm58, %v71, 0.0
    %v73 = vstv %s62
    %v74 = vsel %vm59, %v73, 0.0
    %v75 = vadd.f32 %v72, %v74
    %v76 = vstv %s64
    %v77 = vsel %vm58, %v76, 0.0
    %v78 = vstv %s65
    %v79 = vsel %vm59, %v78, 0.0
    %v80 = vadd.f32 %v77, %v79
    %v81 = vld [vmem:[#allocation2] sm:$0xff]
    %v82 = vmul.f32 %v81, %v70
    %v83 = vld [vmem:[#allocation6] sm:$0xff]
    %v84 = vmul.f32 %v83, %v75
    %v85 = vadd.f32 %v82, %v84
    %v86 = vadd.f32 %v85, %v80
    %87 = vst [vmem:[#allocation9] sm:$0xff] %v86
    // Predicated region
    $region26: #{tpu_custom_call.1} parent=1 // pred_check
      _
    $region27: #{tpu_custom_call.1} parent=1 // pred_check_branch
      %89 = sbr.rel (0) target = $region29
    $region28: #{tpu_custom_call.1} parent=1 // pred_region
      %91 = vsyncadd [#allocation4], 0
      %s93 = sshll.u32 [#allocation9], 4
      %s94 = int_to_ptr.vmem [resolvable:$true] %s93
      %s95 = sshll.u32 %s3, 4
      %s96 = int_to_ptr.hbm [resolvable:$true] %s95
      %98 = dma.vmem_to_hbm [thread:$0]  %s94, 128, %s96, [#allocation4]
    $region29: #{tpu_custom_call.1} parent=1 // pred_fallthru
      _
    // Predicated region
    $region30: #{tpu_custom_call.1} parent=1 // pred_check
      _
    $region31: #{tpu_custom_call.1} parent=1 // pred_check_branch
      %100 = sbr.rel (0) target = $region33
    $region32: #{tpu_custom_call.1} parent=1 // pred_region
      %102 = dma.done [#allocation4], 128
    $region33: #{tpu_custom_call.1} parent=1 // pred_fallthru
      _
    %103 = vsyncpa [#allocation3], 1
    %104 = vsyncpa [#allocation7], 1
    %105 = vsyncpa [#allocation4], 1
    %106 = vsyncpa [#allocation5], 1

</llo_original>
